<compile_context>
chip_gen: v5e
topology: v5e:2x2
jax: 0.10.0
libtpu: 0.0.40
codegen_flags: <defaults>
</compile_context>

<pallas_src>
import functools

import jax
import jax.numpy as jnp
from jax.experimental import pallas as pl
from jax.experimental.pallas import tpu as pltpu


def _round_up(x, m):
    return ((x + m - 1) // m) * m


def _cdiv(a, b):
    return -(-a // b)


def _pad2d(a, rows, cols):
    return jnp.pad(a, ((0, rows - a.shape[0]), (0, cols - a.shape[1])))


def policy_net_kernel(obs_ref, w0_ref, b0_ref, w1_ref, b1_ref, w2_ref, b2_ref, out_ref,
                      *, n_actions):
    # main_net (FLAT): Linear + ReLU.  obs arrives raw f32 (unpadded lanes); cast to bf16 for the MXU.
    x = obs_ref[...].astype(jnp.bfloat16)
    h = jnp.maximum(
        jnp.dot(x, w0_ref[...], preferred_element_type=jnp.float32) + b0_ref[...],
        0.0).astype(jnp.bfloat16)

    # policy head: Linear -> ReLU   (bias/ReLU in f32, matmul operands bf16, f32 MXU accumulate)
    h = jnp.maximum(
        jnp.dot(h, w1_ref[...], preferred_element_type=jnp.float32) + b1_ref[...],
        0.0).astype(jnp.bfloat16)

    # Linear -> Softmax(dim=-1). Padded action lanes already carry -1e30 via the prepared bias,
    # so no in-kernel masking is needed.
    logits = jnp.dot(h, w2_ref[...], preferred_element_type=jnp.float32) + b2_ref[...]
    m = jnp.max(logits, axis=-1, keepdims=True)
    e = jnp.exp(logits - m)
    s = jnp.sum(e, axis=-1, keepdims=True)
    probs = e / s  # exact normalization (mem-bound kernel; divide not on the critical path)

    # Only the real action lanes are written back to HBM (output block last dim == n_actions).
    out_ref[...] = probs[:, :n_actions].astype(out_ref.dtype)


def prepare_params(params):
    """Pad/cast weights once (hoisted out of the per-forward path).

    Returns bf16 weights with feature dims padded to 128 lanes and f32 biases; the final bias has
    its padded action lanes set to -1e30 so the softmax mask is baked in.
    """
    w0, b0, w1, b1, w2, b2 = params
    obs_dim, h0 = w0.shape
    h1 = w1.shape[1]
    n_actions = w2.shape[1]

    h0p = _round_up(h0, 128)
    h1p = _round_up(h1, 128)
    ap = _round_up(n_actions, 128)

    w0_p = _pad2d(w0, obs_dim, h0p).astype(jnp.bfloat16)
    w1_p = _pad2d(w1, h0p, h1p).astype(jnp.bfloat16)
    w2_p = _pad2d(w2, h1p, ap).astype(jnp.bfloat16)
    b0_p = _pad2d(b0, 1, h0p).astype(jnp.float32)
    b1_p = _pad2d(b1, 1, h1p).astype(jnp.float32)
    # Action-lane mask baked into the bias: padded w2 columns are zero, so padded logits equal the
    # padded bias lanes; set them to -1e30 and the kernel needs no iota/where.
    b2_p = jnp.full((1, ap), -1e30, jnp.float32).at[:, :n_actions].set(b2.astype(jnp.float32))
    return (w0_p, b0_p, w1_p, b1_p, w2_p, b2_p)


def policy_net_forward(obs, prepared, *, n_actions, max_tile=1024):
    """obs: [B, obs_dim] float32 (raw, unpadded). Returns [B, n_actions] action probabilities."""
    w0_p, b0_p, w1_p, b1_p, w2_p, b2_p = prepared
    B, obs_dim = obs.shape
    h0p = w0_p.shape[1]
    h1p = w1_p.shape[1]
    ap = w2_p.shape[1]

    # Batch tiling: fewest tiles with tile_b <= max_tile, tile_b a multiple of 8 (so batch padding is
    # < 8 rows per tile, not up to a full tile). Force >= 2 tiles for larger batches so v7x's two
    # TensorCores both get work on the parallel grid axis. Tiny batches get a single minimal tile.
    nt = _cdiv(B, max_tile)
    if B >= 256:
        nt = max(nt, 2)
    tile_b = _round_up(_cdiv(B, nt), 8)
    bp = nt * tile_b

    obs_p = obs if bp == B else jnp.pad(obs, ((0, bp - B), (0, 0)))

    cost = pl.CostEstimate(
        flops=2 * bp * (obs_dim * h0p + h0p * h1p + h1p * ap),
        transcendentals=bp * ap,
        bytes_accessed=(obs_p.size * 4                                     # raw f32 obs stream
                        + (w0_p.size + w1_p.size + w2_p.size) * 2          # resident bf16 weights
                        + (b0_p.size + b1_p.size + b2_p.size) * 4          # resident f32 biases
                        + bp * n_actions * 4),                             # f32 probs writeback
    )

    resident = lambda i: (0, 0)  # weights/biases stay in VMEM across all batch tiles
    out_padded = pl.pallas_call(
        functools.partial(policy_net_kernel, n_actions=n_actions),
        out_shape=jax.ShapeDtypeStruct((bp, n_actions), jnp.float32),
        grid=(nt,),
        in_specs=[
            pl.BlockSpec((tile_b, obs_dim), lambda i: (i, 0)),  # obs: streamed raw per batch tile
            pl.BlockSpec((obs_dim, h0p), resident),             # w0
            pl.BlockSpec((1, h0p), resident),                   # b0
            pl.BlockSpec((h0p, h1p), resident),                 # w1
            pl.BlockSpec((1, h1p), resident),                   # b1
            pl.BlockSpec((h1p, ap), resident),                  # w2
            pl.BlockSpec((1, ap), resident),                    # b2 (padded lanes = -1e30)
        ],
        out_specs=pl.BlockSpec((tile_b, n_actions), lambda i: (i, 0)),  # only real action lanes
        compiler_params=pltpu.CompilerParams(dimension_semantics=("parallel",)),
        cost_estimate=cost,
    )(obs_p, w0_p, b0_p, w1_p, b1_p, w2_p, b2_p)

    return out_padded if bp == B else out_padded[:B]


def init_params(key, obs_dim, output_units, n_units_final, n_actions):
    """Deterministic init mimicking PyTorch's default Linear init (U(-1/sqrt(in), 1/sqrt(in)))."""
    ks = jax.random.split(key, 6)

    def lin(kw, kb, fan_in, fan_out):
        bound = 1.0 / jnp.sqrt(jnp.float32(fan_in))
        w = jax.random.uniform(kw, (fan_in, fan_out), jnp.float32, -bound, bound)
        b = jax.random.uniform(kb, (1, fan_out), jnp.float32, -bound, bound)
        return w, b

    w0, b0 = lin(ks[0], ks[1], obs_dim, output_units)        # main_net FLAT trunk
    w1, b1 = lin(ks[2], ks[3], output_units, n_units_final)  # policy head fc1
    w2, b2 = lin(ks[4], ks[5], n_units_final, n_actions)     # policy head fc2
    return (w0, b0, w1, b1, w2, b2)


if __name__ == "__main__":
    key = jax.random.PRNGKey(0)
    k_obs, k_par = jax.random.split(key)

    # Small shapes consistent with the module:
    batch = 8
    obs_dim = 32          # flat observation size from env_bldr.obs_size
    output_units = 64     # main_net.output_units
    n_units_final = 64    # policy_args.n_units_final
    n_actions = 8         # env_bldr.N_ACTIONS

    obs = jax.random.normal(k_obs, (batch, obs_dim), jnp.float32)
    params = init_params(k_par, obs_dim, output_units, n_units_final, n_actions)

    prepared = prepare_params(params)  # pad/cast once, outside the per-call path
    forward = jax.jit(functools.partial(policy_net_forward, n_actions=n_actions))

    probs = jax.block_until_ready(forward(obs, prepared))

    # Pure-JAX f32 reference check (tolerance loosened for bf16 matmul operands).
    w0, b0, w1, b1, w2, b2 = params
    h = jnp.maximum(obs @ w0 + b0, 0.0)
    h = jnp.maximum(h @ w1 + b1, 0.0)
    ref = jax.nn.softmax(h @ w2 + b2, axis=-1)

    assert probs.shape == (batch, n_actions)
    assert jnp.allclose(jnp.sum(probs, axis=-1), 1.0, atol=1e-3)
    assert jnp.allclose(probs, ref, atol=2e-2)

    print("KERNEL_OK")
</pallas_src>

<mosaic_0001>
module attributes {stable_mosaic.version = 11 : i64} {
  func.func @policy_net_kernel(%arg0: i32, %arg1: memref<8x32xf32, #tpu.memory_space<vmem>>, %arg2: memref<32x128xbf16, #tpu.memory_space<vmem>>, %arg3: memref<1x128xf32, #tpu.memory_space<vmem>>, %arg4: memref<128x128xbf16, #tpu.memory_space<vmem>>, %arg5: memref<1x128xf32, #tpu.memory_space<vmem>>, %arg6: memref<128x128xbf16, #tpu.memory_space<vmem>>, %arg7: memref<1x128xf32, #tpu.memory_space<vmem>>, %arg8: memref<8x8xf32, #tpu.memory_space<vmem>>) attributes {dimension_semantics = [#tpu.dimension_semantics<parallel>], iteration_bounds = array<i64: 1>, scalar_prefetch = 0 : i64, scratch_operands = 0 : i64, tpu.core_type = #tpu.core_type<tc>, window_params = [{transform_indices = @transform_0, window_bounds = array<i64: 8, 32>}, {pipeline_mode = #tpu.pipeline_mode<synchronous>, transform_indices = @transform_1, window_bounds = array<i64: 32, 128>}, {pipeline_mode = #tpu.pipeline_mode<synchronous>, transform_indices = @transform_2, window_bounds = array<i64: 1, 128>}, {pipeline_mode = #tpu.pipeline_mode<synchronous>, transform_indices = @transform_3, window_bounds = array<i64: 128, 128>}, {pipeline_mode = #tpu.pipeline_mode<synchronous>, transform_indices = @transform_4, window_bounds = array<i64: 1, 128>}, {pipeline_mode = #tpu.pipeline_mode<synchronous>, transform_indices = @transform_5, window_bounds = array<i64: 128, 128>}, {pipeline_mode = #tpu.pipeline_mode<synchronous>, transform_indices = @transform_6, window_bounds = array<i64: 1, 128>}, {transform_indices = @transform_7, window_bounds = array<i64: 8, 8>}]} {
    %c0 = arith.constant 0 : index
    %c0_0 = arith.constant 0 : index
    %0 = vector.load %arg1[%c0, %c0_0] : memref<8x32xf32, #tpu.memory_space<vmem>>, vector<8x32xf32>
    %1 = arith.truncf %0 : vector<8x32xf32> to vector<8x32xbf16>
    %c0_1 = arith.constant 0 : index
    %c0_2 = arith.constant 0 : index
    %2 = vector.load %arg2[%c0_1, %c0_2] : memref<32x128xbf16, #tpu.memory_space<vmem>>, vector<32x128xbf16>
    %cst = arith.constant dense<0.000000e+00> : vector<8x128xf32>
    %3 = tpu.matmul %1, %2, %cst {dimension_numbers = #tpu.dot_dimension_numbers<[1], [0], [0], [1], [0, 0, 1, 1], [], []>} : vector<8x32xbf16>, vector<32x128xbf16>, vector<8x128xf32> -> vector<8x128xf32>
    %c0_3 = arith.constant 0 : index
    %c0_4 = arith.constant 0 : index
    %4 = vector.load %arg3[%c0_3, %c0_4] : memref<1x128xf32, #tpu.memory_space<vmem>>, vector<1x128xf32>
    %5 = vector.broadcast %4 : vector<1x128xf32> to vector<8x128xf32>
    %6 = arith.addf %3, %5 : vector<8x128xf32>
    %cst_5 = arith.constant 0.000000e+00 : f32
    %7 = vector.broadcast %cst_5 : f32 to vector<8x128xf32>
    %8 = arith.maximumf %6, %7 : vector<8x128xf32>
    %9 = arith.truncf %8 : vector<8x128xf32> to vector<8x128xbf16>
    %c0_6 = arith.constant 0 : index
    %c0_7 = arith.constant 0 : index
    %10 = vector.load %arg4[%c0_6, %c0_7] : memref<128x128xbf16, #tpu.memory_space<vmem>>, vector<128x128xbf16>
    %cst_8 = arith.constant dense<0.000000e+00> : vector<8x128xf32>
    %11 = tpu.matmul %9, %10, %cst_8 {dimension_numbers = #tpu.dot_dimension_numbers<[1], [0], [0], [1], [0, 0, 1, 1], [], []>} : vector<8x128xbf16>, vector<128x128xbf16>, vector<8x128xf32> -> vector<8x128xf32>
    %c0_9 = arith.constant 0 : index
    %c0_10 = arith.constant 0 : index
    %12 = vector.load %arg5[%c0_9, %c0_10] : memref<1x128xf32, #tpu.memory_space<vmem>>, vector<1x128xf32>
    %13 = vector.broadcast %12 : vector<1x128xf32> to vector<8x128xf32>
    %14 = arith.addf %11, %13 : vector<8x128xf32>
    %cst_11 = arith.constant 0.000000e+00 : f32
    %15 = vector.broadcast %cst_11 : f32 to vector<8x128xf32>
    %16 = arith.maximumf %14, %15 : vector<8x128xf32>
    %17 = arith.truncf %16 : vector<8x128xf32> to vector<8x128xbf16>
    %c0_12 = arith.constant 0 : index
    %c0_13 = arith.constant 0 : index
    %18 = vector.load %arg6[%c0_12, %c0_13] : memref<128x128xbf16, #tpu.memory_space<vmem>>, vector<128x128xbf16>
    %cst_14 = arith.constant dense<0.000000e+00> : vector<8x128xf32>
    %19 = tpu.matmul %17, %18, %cst_14 {dimension_numbers = #tpu.dot_dimension_numbers<[1], [0], [0], [1], [0, 0, 1, 1], [], []>} : vector<8x128xbf16>, vector<128x128xbf16>, vector<8x128xf32> -> vector<8x128xf32>
    %c0_15 = arith.constant 0 : index
    %c0_16 = arith.constant 0 : index
    %20 = vector.load %arg7[%c0_15, %c0_16] : memref<1x128xf32, #tpu.memory_space<vmem>>, vector<1x128xf32>
    %21 = vector.broadcast %20 : vector<1x128xf32> to vector<8x128xf32>
    %22 = arith.addf %19, %21 : vector<8x128xf32>
    %cst_17 = arith.constant dense<0xFF800000> : vector<8xf32>
    %23 = vector.multi_reduction <maximumf>, %22, %cst_17 [1] : vector<8x128xf32> to vector<8xf32>
    %24 = vector.shape_cast %23 : vector<8xf32> to vector<8x1xf32>
    %25 = vector.broadcast %24 : vector<8x1xf32> to vector<8x128xf32>
    %26 = arith.subf %22, %25 : vector<8x128xf32>
    %27 = math.exp %26 : vector<8x128xf32>
    %cst_18 = arith.constant dense<0.000000e+00> : vector<8xf32>
    %28 = vector.multi_reduction <add>, %27, %cst_18 [1] : vector<8x128xf32> to vector<8xf32>
    %29 = vector.shape_cast %28 : vector<8xf32> to vector<8x1xf32>
    %30 = vector.broadcast %29 : vector<8x1xf32> to vector<8x128xf32>
    %31 = arith.divf %27, %30 : vector<8x128xf32>
    %32 = vector.extract_strided_slice %31 {offsets = [0, 0], sizes = [8, 8], strides = [1, 1]} : vector<8x128xf32> to vector<8x8xf32>
    %c0_19 = arith.constant 0 : index
    %c0_20 = arith.constant 0 : index
    %33 = vector.load %arg8[%c0_19, %c0_20] : memref<8x8xf32, #tpu.memory_space<vmem>>, vector<8x8xf32>
    tpu.vector_store %arg8[%c0_19, %c0_20], %32 {strides = array<i32>} : memref<8x8xf32, #tpu.memory_space<vmem>>, vector<8x8xf32>,
    return
  }
  func.func @transform_0(%arg0: i32) -> (i32, i32) {
    %c0_i32 = arith.constant 0 : i32
    %c0_i32_0 = arith.constant 0 : i32
    return %arg0, %c0_i32 : i32, i32
  }
  func.func @transform_1(%arg0: i32) -> (i32, i32) {
    %c0_i32 = arith.constant 0 : i32
    %c0_i32_0 = arith.constant 0 : i32
    %c0_i32_1 = arith.constant 0 : i32
    return %c0_i32, %c0_i32_0 : i32, i32
  }
  func.func @transform_2(%arg0: i32) -> (i32, i32) {
    %c0_i32 = arith.constant 0 : i32
    %c0_i32_0 = arith.constant 0 : i32
    %c0_i32_1 = arith.constant 0 : i32
    return %c0_i32, %c0_i32_0 : i32, i32
  }
  func.func @transform_3(%arg0: i32) -> (i32, i32) {
    %c0_i32 = arith.constant 0 : i32
    %c0_i32_0 = arith.constant 0 : i32
    %c0_i32_1 = arith.constant 0 : i32
    return %c0_i32, %c0_i32_0 : i32, i32
  }
  func.func @transform_4(%arg0: i32) -> (i32, i32) {
    %c0_i32 = arith.constant 0 : i32
    %c0_i32_0 = arith.constant 0 : i32
    %c0_i32_1 = arith.constant 0 : i32
    return %c0_i32, %c0_i32_0 : i32, i32
  }
  func.func @transform_5(%arg0: i32) -> (i32, i32) {
    %c0_i32 = arith.constant 0 : i32
    %c0_i32_0 = arith.constant 0 : i32
    %c0_i32_1 = arith.constant 0 : i32
    return %c0_i32, %c0_i32_0 : i32, i32
  }
  func.func @transform_6(%arg0: i32) -> (i32, i32) {
    %c0_i32 = arith.constant 0 : i32
    %c0_i32_0 = arith.constant 0 : i32
    %c0_i32_1 = arith.constant 0 : i32
    return %c0_i32, %c0_i32_0 : i32, i32
  }
  func.func @transform_7(%arg0: i32) -> (i32, i32) {
    %c0_i32 = arith.constant 0 : i32
    %c0_i32_0 = arith.constant 0 : i32
    return %arg0, %c0_i32 : i32, i32
  }
}

</mosaic_0001>

<llo_original>
// kernel: policy_net_forward.1
$region0: #{policy_net_forward.1}
  #allocation0 [shape = 'u32[]', space=smem, size = 0x4, offset = 0x4, fixed_abs, tag = 'smem constant byte address 0x4 - core index']
  #allocation1 [shape = 'u32[72,128]{1,0:T(1,128)}', space=vmem, size = 0x9000, scoped, tag = 'internal scratch']
  %s0 = inlined_call_operand.hbm [shape: f32[8,32], index: 0, kind: input, shape index: {}]
  %s1 = inlined_call_operand.hbm [shape: bf16[32,128], index: 1, kind: input, shape index: {}]
  %s2 = inlined_call_operand.vmem [shape: f32[1,128], index: 2, kind: input, shape index: {}]
  %s3 = inlined_call_operand.hbm [shape: bf16[128,128], index: 3, kind: input, shape index: {}]
  %s4 = inlined_call_operand.vmem [shape: f32[1,128], index: 4, kind: input, shape index: {}]
  %s5 = inlined_call_operand.hbm [shape: bf16[128,128], index: 5, kind: input, shape index: {}]
  %s6 = inlined_call_operand.vmem [shape: f32[1,128], index: 6, kind: input, shape index: {}]
  %s7 = inlined_call_operand.hbm [shape: f32[8,8], index: 7, kind: output, shape index: {}]
  %s8 = sld [smem:[#allocation0]]
  $region54: #{policy_net_forward.1} parent=0
    _
  %s10 = ssub.s32 1, %s8
  %s11 = scalar_select 0, %s10, %s8
  $region1: #{policy_net_forward.1} parent=0
    #allocation2 [shape = 'u8[4096]{0}', space=vmem, size = 0x1000, scoped, tag = 'input window, operand 0, single buffered']
    #allocation3 [shape = 's32[1]{0}', space=sflag, size = 0x4, scoped, tag = 'scoped memory for policy_net_forward.1']
    #allocation4 [shape = 's32[1]{0}', space=sflag, size = 0x4, scoped, tag = 'scoped memory for policy_net_forward.1']
    #allocation5 [shape = 'u8[8192]{0}', space=vmem, size = 0x2000, scoped, tag = 'input window, operand 1, single buffered']
    #allocation6 [shape = 's32[1]{0}', space=sflag, size = 0x4, scoped, tag = 'scoped memory for policy_net_forward.1']
    #allocation7 [shape = 'u8[32768]{0}', space=vmem, size = 0x8000, scoped, tag = 'input window, operand 3, single buffered']
    #allocation8 [shape = 'u8[32768]{0}', space=vmem, size = 0x8000, scoped, tag = 'input window, operand 5, single buffered']
    #allocation9 [shape = 's32[1]{0}', space=sflag, size = 0x4, scoped, tag = 'scoped memory for policy_net_forward.1']
    #allocation10 [shape = 'u8[4096]{0}', space=vmem, size = 0x1000, scoped, tag = 'output window, operand 0, single buffered']
    %12 = vsyncpa [#allocation3], 0
    %13 = vsyncpa [#allocation6], 0
    %14 = vsyncpa [#allocation9], 0
    %15 = vsyncpa [#allocation4], 0
    // Predicated region
    $region2: #{policy_net_forward.1} parent=1 // pred_check
      _
    $region3: #{policy_net_forward.1} parent=1 // pred_check_branch
      %17 = sbr.rel (0) target = $region5
    $region4: #{policy_net_forward.1} parent=1 // pred_region
      %19 = vsyncadd [#allocation3], 0
      %s21 = sshll.u32 %s0, 4
      %s22 = int_to_ptr.hbm [resolvable:$true] %s21
      %s23 = sshll.u32 [#allocation2], 4
      %s24 = int_to_ptr.vmem [resolvable:$true] %s23
      %26 = dma.hbm_to_vmem [thread:$0]  %s22, 128, %s24, [#allocation3]
    $region5: #{policy_net_forward.1} parent=1 // pred_fallthru
      _
    // Predicated region
    $region6: #{policy_net_forward.1} parent=1 // pred_check
      _
    $region7: #{policy_net_forward.1} parent=1 // pred_check_branch
      %28 = sbr.rel (0) target = $region9
    $region8: #{policy_net_forward.1} parent=1 // pred_region
      %30 = vsyncadd [#allocation6], 0
      %s31 = sshll.u32 %s1, 4
      %s32 = int_to_ptr.hbm [resolvable:$true] %s31
      %s33 = sshll.u32 [#allocation5], 4
      %s34 = int_to_ptr.vmem [resolvable:$true] %s33
      %39 = dma.hbm_to_vmem [thread:$0]  %s32, 256, %s34, [#allocation6], 64, 64, 4
    $region9: #{policy_net_forward.1} parent=1 // pred_fallthru
      _
    // Predicated region
    $region10: #{policy_net_forward.1} parent=1 // pred_check
      _
    $region11: #{policy_net_forward.1} parent=1 // pred_check_branch
      %41 = sbr.rel (0) target = $region13
    $region12: #{policy_net_forward.1} parent=1 // pred_region
      _
    $region13: #{policy_net_forward.1} parent=1 // pred_fallthru
      _
    // Predicated region
    $region14: #{policy_net_forward.1} parent=1 // pred_check
      _
    $region15: #{policy_net_forward.1} parent=1 // pred_check_branch
      %43 = sbr.rel (0) target = $region17
    $region16: #{policy_net_forward.1} parent=1 // pred_region
      %45 = vsyncadd [#allocation6], 0
      %s46 = sshll.u32 %s3, 4
      %s47 = int_to_ptr.hbm [resolvable:$true] %s46
      %s48 = sshll.u32 [#allocation7], 4
      %s49 = int_to_ptr.vmem [resolvable:$true] %s48
      %54 = dma.hbm_to_vmem [thread:$0]  %s47, 1024, %s49, [#allocation6], 64, 64, 4
    $region17: #{policy_net_forward.1} parent=1 // pred_fallthru
      _
    // Predicated region
    $region18: #{policy_net_forward.1} parent=1 // pred_check
      _
    $region19: #{policy_net_forward.1} parent=1 // pred_check_branch
      %56 = sbr.rel (0) target = $region21
    $region20: #{policy_net_forward.1} parent=1 // pred_region
      _
    $region21: #{policy_net_forward.1} parent=1 // pred_fallthru
      _
    // Predicated region
    $region22: #{policy_net_forward.1} parent=1 // pred_check
      _
    $region23: #{policy_net_forward.1} parent=1 // pred_check_branch
      %58 = sbr.rel (0) target = $region25
    $region24: #{policy_net_forward.1} parent=1 // pred_region
      %60 = vsyncadd [#allocation9], 0
      %s61 = sshll.u32 %s5, 4
      %s62 = int_to_ptr.hbm [resolvable:$true] %s61
      %s63 = sshll.u32 [#allocation8], 4
      %s64 = int_to_ptr.vmem [resolvable:$true] %s63
      %69 = dma.hbm_to_vmem [thread:$0]  %s62, 1024, %s64, [#allocation9], 64, 64, 4
    $region25: #{policy_net_forward.1} parent=1 // pred_fallthru
      _
    // Predicated region
    $region26: #{policy_net_forward.1} parent=1 // pred_check
      _
    $region27: #{policy_net_forward.1} parent=1 // pred_check_branch
      %71 = sbr.rel (0) target = $region29
    $region28: #{policy_net_forward.1} parent=1 // pred_region
      _
    $region29: #{policy_net_forward.1} parent=1 // pred_fallthru
      _
    // Predicated region
    $region30: #{policy_net_forward.1} parent=1 // pred_check
      _
    $region31: #{policy_net_forward.1} parent=1 // pred_check_branch
      %73 = sbr.rel (0) target = $region33
    $region32: #{policy_net_forward.1} parent=1 // pred_region
      %75 = dma.done [#allocation3], 128
    $region33: #{policy_net_forward.1} parent=1 // pred_fallthru
      _
    // Predicated region
    $region34: #{policy_net_forward.1} parent=1 // pred_check
      _
    $region35: #{policy_net_forward.1} parent=1 // pred_check_branch
      %77 = sbr.rel (0) target = $region37
    $region36: #{policy_net_forward.1} parent=1 // pred_region
      %79 = dma.done [#allocation6], 256
    $region37: #{policy_net_forward.1} parent=1 // pred_fallthru
      _
    // Predicated region
    $region38: #{policy_net_forward.1} parent=1 // pred_check
      _
    $region39: #{policy_net_forward.1} parent=1 // pred_check_branch
      %81 = sbr.rel (0) target = $region41
    $region40: #{policy_net_forward.1} parent=1 // pred_region
      %83 = dma.done [#allocation6], 1024
    $region41: #{policy_net_forward.1} parent=1 // pred_fallthru
      _
    // Predicated region
    $region42: #{policy_net_forward.1} parent=1 // pred_check
      _
    $region43: #{policy_net_forward.1} parent=1 // pred_check_branch
      %85 = sbr.rel (0) target = $region45
    $region44: #{policy_net_forward.1} parent=1 // pred_region
      %87 = dma.done [#allocation9], 1024
    $region45: #{policy_net_forward.1} parent=1 // pred_fallthru
      _
    %v89 = vld [vmem:[#allocation2] sm:$0xff]
    %v90 = vpack.c.bf16 %v89, %v89
    %v91 = vld [vmem:[#allocation5] sm:$0xf]
    %v92 = vld [vmem:[#allocation5 + $0x4] sm:$0xf]
    %v93 = vld [vmem:[#allocation5 + $0x8] sm:$0xf]
    %v94 = vld [vmem:[#allocation5 + $0xc] sm:$0xf]
    %v95 = vld [vmem:[%s2] sm:$0x1]
    %v97 = vperm.slane %v95, 0
    %v103 = vunpack.c.l.b16 %v91
    %v104 = vunpack.c.l.b16 %v92
    %v105 = vunpack.c.l.b16 %v93
    %v106 = vunpack.c.l.b16 %v94
    %v107 = vpack.c.b16 %v104, %v103
    %v108 = vpack.c.b16 %v106, %v105
    %vm111 = vcmask 261120
    %v113 = vsel %vm111, %v90, 0
    %115 = vmatpush.bf16.msra.mxu0 0
    %116 = vmatpush.bf16.msra.mxu0 0
    %117 = vmatpush.bf16.msra.mxu0 0
    %118 = vmatpush.bf16.msra.mxu0 0
    %119 = vmatpush.bf16.msra.mxu0 0
    %120 = vmatpush.bf16.msra.mxu0 0
    %121 = vmatpush.bf16.msra.mxu0 %v108
    %122 = vmatpush.bf16.msra.mxu0 %v107
    %123 = vmatmul.bf16.gmra.mxu0 %v113
    %v124 = vpop.f32.mrf.mxu0
    %v125 = vadd.f32 %v97, %v124
    %v126 = vpop.f32.mrf.mxu0
    %127 = vdwg.mxu0
    %v128 = vmax.f32 %v125, 0.0
    %v129 = vpack.c.bf16 %v128, %v128
    %v130 = vld [vmem:[#allocation7] sm:$0xf]
    %v131 = vld [vmem:[#allocation7 + $0x4] sm:$0xf]
    %v132 = vld [vmem:[#allocation7 + $0x8] sm:$0xf]
    %v133 = vld [vmem:[#allocation7 + $0xc] sm:$0xf]
    %v134 = vld [vmem:[#allocation7 + $0x10] sm:$0xf]
    %v135 = vld [vmem:[#allocation7 + $0x14] sm:$0xf]
    %v136 = vld [vmem:[#allocation7 + $0x18] sm:$0xf]
    %v137 = vld [vmem:[#allocation7 + $0x1c] sm:$0xf]
    %v138 = vld [vmem:[#allocation7 + $0x20] sm:$0xf]
    %v139 = vld [vmem:[#allocation7 + $0x24] sm:$0xf]
    %v140 = vld [vmem:[#allocation7 + $0x28] sm:$0xf]
    %v141 = vld [vmem:[#allocation7 + $0x2c] sm:$0xf]
    %v142 = vld [vmem:[#allocation7 + $0x30] sm:$0xf]
    %v143 = vld [vmem:[#allocation7 + $0x34] sm:$0xf]
    %v144 = vld [vmem:[#allocation7 + $0x38] sm:$0xf]
    %v145 = vld [vmem:[#allocation7 + $0x3c] sm:$0xf]
    %v146 = vld [vmem:[%s4] sm:$0x1]
    %v148 = vperm.slane %v146, 0
    %v166 = vunpack.c.l.b16 %v130
    %v167 = vunpack.c.l.b16 %v131
    %v168 = vunpack.c.l.b16 %v132
    %v169 = vunpack.c.l.b16 %v133
    %v170 = vunpack.c.l.b16 %v134
    %v171 = vunpack.c.l.b16 %v135
    %v172 = vunpack.c.l.b16 %v136
    %v173 = vunpack.c.l.b16 %v137
    %v174 = vunpack.c.l.b16 %v138
    %v175 = vunpack.c.l.b16 %v139
    %v176 = vunpack.c.l.b16 %v140
    %v177 = vunpack.c.l.b16 %v141
    %v178 = vunpack.c.l.b16 %v142
    %v179 = vunpack.c.l.b16 %v143
    %v180 = vunpack.c.l.b16 %v144
    %v181 = vunpack.c.l.b16 %v145
    %v182 = vpack.c.b16 %v167, %v166
    %v183 = vpack.c.b16 %v169, %v168
    %v184 = vpack.c.b16 %v171, %v170
    %v185 = vpack.c.b16 %v173, %v172
    %v186 = vpack.c.b16 %v175, %v174
    %v187 = vpack.c.b16 %v177, %v176
    %v188 = vpack.c.b16 %v179, %v178
    %v189 = vpack.c.b16 %v181, %v180
    %198 = vmatpush.bf16.msra.mxu0 %v189
    %199 = vmatpush.bf16.msra.mxu0 %v188
    %200 = vmatpush.bf16.msra.mxu0 %v187
    %201 = vmatpush.bf16.msra.mxu0 %v186
    %202 = vmatpush.bf16.msra.mxu0 %v185
    %203 = vmatpush.bf16.msra.mxu0 %v184
    %204 = vmatpush.bf16.msra.mxu0 %v183
    %205 = vmatpush.bf16.msra.mxu0 %v182
    %206 = vmatmul.bf16.gmra.mxu0 %v129
    %v207 = vpop.f32.mrf.mxu0
    %v208 = vadd.f32 %v148, %v207
    %v209 = vpop.f32.mrf.mxu0
    %210 = vdwg.mxu0
    %v211 = vmax.f32 %v208, 0.0
    %v212 = vpack.c.bf16 %v211, %v211
    %v213 = vld [vmem:[#allocation8] sm:$0xf]
    %v214 = vld [vmem:[#allocation8 + $0x4] sm:$0xf]
    %v215 = vld [vmem:[#allocation8 + $0x8] sm:$0xf]
    %v216 = vld [vmem:[#allocation8 + $0xc] sm:$0xf]
    %v217 = vld [vmem:[#allocation8 + $0x10] sm:$0xf]
    %v218 = vld [vmem:[#allocation8 + $0x14] sm:$0xf]
    %v219 = vld [vmem:[#allocation8 + $0x18] sm:$0xf]
    %v220 = vld [vmem:[#allocation8 + $0x1c] sm:$0xf]
    %v221 = vld [vmem:[#allocation8 + $0x20] sm:$0xf]
    %v222 = vld [vmem:[#allocation8 + $0x24] sm:$0xf]
    %v223 = vld [vmem:[#allocation8 + $0x28] sm:$0xf]
    %v224 = vld [vmem:[#allocation8 + $0x2c] sm:$0xf]
    %v225 = vld [vmem:[#allocation8 + $0x30] sm:$0xf]
    %v226 = vld [vmem:[#allocation8 + $0x34] sm:$0xf]
    %v227 = vld [vmem:[#allocation8 + $0x38] sm:$0xf]
    %v228 = vld [vmem:[#allocation8 + $0x3c] sm:$0xf]
    %v229 = vld [vmem:[%s6] sm:$0x1]
    %v231 = vperm.slane %v229, 0
    %v249 = vunpack.c.l.b16 %v213
    %v250 = vunpack.c.l.b16 %v214
    %v251 = vunpack.c.l.b16 %v215
    %v252 = vunpack.c.l.b16 %v216
    %v253 = vunpack.c.l.b16 %v217
    %v254 = vunpack.c.l.b16 %v218
    %v255 = vunpack.c.l.b16 %v219
    %v256 = vunpack.c.l.b16 %v220
    %v257 = vunpack.c.l.b16 %v221
    %v258 = vunpack.c.l.b16 %v222
    %v259 = vunpack.c.l.b16 %v223
    %v260 = vunpack.c.l.b16 %v224
    %v261 = vunpack.c.l.b16 %v225
    %v262 = vunpack.c.l.b16 %v226
    %v263 = vunpack.c.l.b16 %v227
    %v264 = vunpack.c.l.b16 %v228
    %v265 = vpack.c.b16 %v250, %v249
    %v266 = vpack.c.b16 %v252, %v251
    %v267 = vpack.c.b16 %v254, %v253
    %v268 = vpack.c.b16 %v256, %v255
    %v269 = vpack.c.b16 %v258, %v257
    %v270 = vpack.c.b16 %v260, %v259
    %v271 = vpack.c.b16 %v262, %v261
    %v272 = vpack.c.b16 %v264, %v263
    %281 = vmatpush.bf16.msra.mxu0 %v272
    %282 = vmatpush.bf16.msra.mxu0 %v271
    %283 = vmatpush.bf16.msra.mxu0 %v270
    %284 = vmatpush.bf16.msra.mxu0 %v269
    %285 = vmatpush.bf16.msra.mxu0 %v268
    %286 = vmatpush.bf16.msra.mxu0 %v267
    %287 = vmatpush.bf16.msra.mxu0 %v266
    %288 = vmatpush.bf16.msra.mxu0 %v265
    %289 = vmatmul.bf16.gmra.mxu0 %v212
    %v290 = vpop.f32.mrf.mxu0
    %v291 = vadd.f32 %v231, %v290
    %v292 = vpop.f32.mrf.mxu0
    %293 = vdwg.mxu0
    %294 = vmax.xlane.f32.xlu0 %v291
    %v295 = vpop.xlane.xlu0 %294
    %v296 = vsub.f32 %v291, %v295
    %v297 = vmul.f32 %v296, 1.442695
    %v298 = vpow.pop %v297
    %299 = vadd.xlane.f32.xlu0 %v298
    %v300 = vpop.xlane.xlu0 %299
    %v301 = vrcp.pop %v300
    %v302 = vmul.f32 %v300, %v301
    %v303 = vsub.f32 1.0, %v302
    %v304 = vmul.f32 %v301, %v303
    %v305 = vadd.f32 %v301, %v304
    %vm306 = vweird.f32 %v300
    %vm307 = vweird.f32 %v301
    %vm308 = vmor %vm306, %vm307
    %v309 = vsel %vm308, %v301, %v305
    %v310 = vand.u32 2147483647, %v300
    %vm311 = vcmp.eq.f32.partialorder %v310, 8.507059e+37
    %v312 = vand.u32 %v300, 2147483648
    %v313 = vor.u32 1.1754944e-38, %v312
    %v314 = vsel %vm311, %v313, %v309
    %v315 = vmul.f32 %v298, %v314
    %vm316 = vcmask 64512
    %317 = vst.msk [vmem:[#allocation10] sm:$0xff] %vm316, %v315
    // Predicated region
    $region46: #{policy_net_forward.1} parent=1 // pred_check
      _
    $region47: #{policy_net_forward.1} parent=1 // pred_check_branch
      %319 = sbr.rel (0) target = $region49
    $region48: #{policy_net_forward.1} parent=1 // pred_region
      %321 = vsyncadd [#allocation4], 0
      %s323 = sshll.u32 [#allocation10], 4
      %s324 = int_to_ptr.vmem [resolvable:$true] %s323
      %s325 = sshll.u32 %s7, 4
      %s326 = int_to_ptr.hbm [resolvable:$true] %s325
      %328 = dma.vmem_to_hbm [thread:$0]  %s324, 128, %s326, [#allocation4]
    $region49: #{policy_net_forward.1} parent=1 // pred_fallthru
      _
    // Predicated region
    $region50: #{policy_net_forward.1} parent=1 // pred_check
      _
    $region51: #{policy_net_forward.1} parent=1 // pred_check_branch
      %330 = sbr.rel (0) target = $region53
    $region52: #{policy_net_forward.1} parent=1 // pred_region
      %332 = dma.done [#allocation4], 128
    $region53: #{policy_net_forward.1} parent=1 // pred_fallthru
      _
    %333 = vsyncpa [#allocation3], 1
    %334 = vsyncpa [#allocation6], 1
    %335 = vsyncpa [#allocation9], 1
    %336 = vsyncpa [#allocation4], 1

</llo_original>
